<compile_context>
chip_gen: v5e
topology: v5e:2x2
jax: 0.10.0
libtpu: 0.0.40
codegen_flags: <defaults>
</compile_context>

<pallas_src>
import numpy as np
import jax
import jax.numpy as jnp
from jax.experimental import pallas as pl
from jax.experimental.pallas import tpu as pltpu

# ----------------------------- model constants ------------------------------
MAX_L = 2
RMAXL = MAX_L + 1
NANG = RMAXL * RMAXL          # 9
NWAVE = 8
CUTOFF = 4.0
NCON = 64
ITER_LOOP = 3
EMB_NL = [1, 8, 8]
OUT_NL = [64, 64, 64]
INDEX_L = np.zeros(NANG, dtype=np.int32)
for l in range(RMAXL):
    INDEX_L[l * l:(l + 1) * (l + 1)] = l

CO_PAD = 128                  # NANG*NWAVE = 72 padded to a full lane width
PAIR_TILE = 512               # pairs per grid step (lane axis)
ATOM_TILE = 128               # atoms per grid step (lane axis)

# real solid-harmonic constants (l = 0, 1, 2)
C00 = 0.28209479177387814
C1 = 0.4886025119029199
C2A = 1.0925484305920792
C20 = 0.31539156525252005
C2B = 0.5462742152960396

# TODO(synk): MLP.NNMod internals (residual blocks, learnable "Relu_like" activation) and
# sph_cal.SPH_CAL's exact recursion/ordering are not available; approximated with SiLU MLP +
# LayerNorm and standard real solid harmonics (same as the previous accepted version).


def _dot_bf16(a, b):
    """MXU matmul with bf16 operands and f32 accumulation (used by kernel AND ref)."""
    return jnp.dot(a.astype(jnp.bfloat16), b.astype(jnp.bfloat16),
                   preferred_element_type=jnp.float32)


# ============================ pair-orbital kernel ============================
def _pair_kernel(dv_ref, emb_ref, out_ref):
    x = dv_ref[0:1, :]
    y = dv_ref[1:2, :]
    z = dv_ref[2:3, :]                                   # (1, TP)
    d2 = x * x + y * y + z * z
    d = jnp.sqrt(d2)
    cut = jnp.square(0.5 * jnp.cos(d * (np.pi / CUTOFF)) + 0.5)   # (1, TP)

    c = emb_ref[0:NWAVE, :]                              # (NWAVE, TP)
    alpha = emb_ref[NWAVE:2 * NWAVE, :]
    rs = emb_ref[2 * NWAVE:3 * NWAVE, :]
    radial = jnp.exp(-jnp.square(alpha * (d - rs)))      # (NWAVE, TP)

    # padded pairs have emb == 0 -> c == 0 -> prod == 0, so no explicit mask is needed
    prod = cut * radial * c                              # (NWAVE, TP)

    sph_rows = (
        jnp.full_like(x, C00),
        C1 * y, C1 * z, C1 * x,
        C2A * x * y, C2A * y * z,
        C20 * (3.0 * z * z - d2),
        C2A * x * z,
        C2B * (x * x - y * y),
    )
    # flat (NANG*NWAVE, TP) orbital, written one 8-sublane-aligned block per angular index
    for k in range(NANG):
        out_ref[k * NWAVE:(k + 1) * NWAVE, :] = sph_rows[k] * prod


def _pair_orbital_pallas(dv_fm, emb_fm):
    # dv_fm: (3, P), emb_fm: (3*NWAVE, P) feature-major
    p = dv_fm.shape[1]
    tp = PAIR_TILE
    ppad = ((p + tp - 1) // tp) * tp
    dv = jnp.pad(dv_fm.astype(jnp.float32), ((0, 0), (0, ppad - p)))
    em = jnp.pad(emb_fm.astype(jnp.float32), ((0, 0), (0, ppad - p)))
    out = pl.pallas_call(
        _pair_kernel,
        out_shape=jax.ShapeDtypeStruct((NANG * NWAVE, ppad), jnp.float32),
        grid=(ppad // tp,),
        in_specs=[
            pl.BlockSpec((3, tp), lambda i: (0, i)),
            pl.BlockSpec((3 * NWAVE, tp), lambda i: (0, i)),
        ],
        out_specs=pl.BlockSpec((NANG * NWAVE, tp), lambda i: (0, i)),
        compiler_params=pltpu.CompilerParams(dimension_semantics=("parallel",)),
    )(dv, em)
    return out[:, :p]                                    # (72, P)


def _pair_orbital_ref(dv_fm, emb_fm):
    x, y, z = dv_fm[0:1], dv_fm[1:2], dv_fm[2:3]
    d2 = x * x + y * y + z * z
    d = jnp.sqrt(d2)
    cut = jnp.square(0.5 * jnp.cos(d * (np.pi / CUTOFF)) + 0.5)
    c = emb_fm[0:NWAVE]
    alpha = emb_fm[NWAVE:2 * NWAVE]
    rs = emb_fm[2 * NWAVE:3 * NWAVE]
    radial = jnp.exp(-jnp.square(alpha * (d - rs)))
    prod = cut * radial * c
    sph = jnp.concatenate([
        jnp.full_like(x, C00),
        C1 * y, C1 * z, C1 * x,
        C2A * x * y, C2A * y * z,
        C20 * (3.0 * z * z - d2),
        C2A * x * z,
        C2B * (x * x - y * y),
    ], axis=0)                                           # (NANG, P)
    return (sph[:, None, :] * prod[None, :, :]).reshape(NANG * NWAVE, -1)


@jax.custom_vjp
def pair_orbital(dv_fm, emb_fm):
    return _pair_orbital_pallas(dv_fm, emb_fm)


def _pair_orbital_fwd(dv_fm, emb_fm):
    return _pair_orbital_pallas(dv_fm, emb_fm), (dv_fm, emb_fm)


def _pair_orbital_bwd(res, g):
    return jax.vjp(_pair_orbital_ref, *res)[1](g)


pair_orbital.defvjp(_pair_orbital_fwd, _pair_orbital_bwd)


# ================= contraction + density + output-MLP kernel ================
def _atom_kernel(co_ref, cc_ref, sel_ref, lc_ref, w1_ref, b1_ref, w2_ref, b2_ref,
                 g_ref, be_ref, w3_ref, b3_ref, out_ref):
    co = co_ref[...]                                         # (CO_PAD, TA), atoms on lanes
    # all 9 angular contractions fused into one block-diagonal MXU matmul
    contracted = _dot_bf16(cc_ref[...], co)                  # (NANG*NCON, TA)
    sq = contracted * contracted
    # sum squares over the 9 angular groups via a 0/1 selector matmul
    dens = jnp.dot(sel_ref[...], sq,
                   preferred_element_type=jnp.float32)       # (NCON, TA)
    dens = dens * lc_ref[...]                                # density

    h = jax.nn.silu(_dot_bf16(w1_ref[...], dens) + b1_ref[...])
    h = jax.nn.silu(_dot_bf16(w2_ref[...], h) + b2_ref[...])
    mu = jnp.mean(h, axis=0, keepdims=True)                  # LayerNorm over features
    var = jnp.mean((h - mu) ** 2, axis=0, keepdims=True)
    h = (h - mu) * jax.lax.rsqrt(var + 1e-5) * g_ref[...] + be_ref[...]
    # lane-dense (1, TA) store: one scalar per atom on the lane axis
    out_ref[...] = jnp.sum(h * w3_ref[...], axis=0, keepdims=True) + b3_ref[...]


def _atom_output_pallas(co_fm, cc_bdT, selT, lc_fm, w1T, b1c, w2T, b2c, gc, bec, w3c, b3):
    n = co_fm.shape[1]
    ta = ATOM_TILE
    npad = ((n + ta - 1) // ta) * ta
    co_p = jnp.pad(co_fm.astype(jnp.float32), ((0, 0), (0, npad - n)))
    lc_p = jnp.pad(lc_fm.astype(jnp.float32), ((0, 0), (0, npad - n)))
    const = lambda i: (0, 0)
    out = pl.pallas_call(
        _atom_kernel,
        out_shape=jax.ShapeDtypeStruct((1, npad), jnp.float32),
        grid=(npad // ta,),
        in_specs=[
            pl.BlockSpec((CO_PAD, ta), lambda i: (0, i)),        # center orbital (feature-major)
            pl.BlockSpec((NANG * NCON, CO_PAD), const),          # block-diag contracted coeff^T
            pl.BlockSpec((NCON, NANG * NCON), const),            # 0/1 group-sum selector
            pl.BlockSpec((NCON, ta), lambda i: (0, i)),          # local_coeff (feature-major)
            pl.BlockSpec((NCON, NCON), const),                   # w1^T
            pl.BlockSpec((NCON, 1), const),                      # b1 (column)
            pl.BlockSpec((NCON, NCON), const),                   # w2^T
            pl.BlockSpec((NCON, 1), const),                      # b2 (column)
            pl.BlockSpec((NCON, 1), const),                      # LN gamma (column)
            pl.BlockSpec((NCON, 1), const),                      # LN beta (column)
            pl.BlockSpec((NCON, 1), const),                      # w3 (column)
            pl.BlockSpec((1, 1), const),                         # b3
        ],
        out_specs=pl.BlockSpec((1, ta), lambda i: (0, i)),
        compiler_params=pltpu.CompilerParams(dimension_semantics=("parallel",)),
    )(co_p, cc_bdT, selT, lc_p, w1T, b1c, w2T, b2c, gc, bec, w3c, b3)
    return out[:, :n]                                            # (1, n)


def _atom_output_ref(co_fm, cc_bdT, selT, lc_fm, w1T, b1c, w2T, b2c, gc, bec, w3c, b3):
    contracted = _dot_bf16(cc_bdT, co_fm)
    sq = contracted * contracted
    dens = jnp.dot(selT, sq, preferred_element_type=jnp.float32) * lc_fm
    h = jax.nn.silu(_dot_bf16(w1T, dens) + b1c)
    h = jax.nn.silu(_dot_bf16(w2T, h) + b2c)
    mu = jnp.mean(h, axis=0, keepdims=True)
    var = jnp.mean((h - mu) ** 2, axis=0, keepdims=True)
    h = (h - mu) * jax.lax.rsqrt(var + 1e-5) * gc + bec
    return jnp.sum(h * w3c, axis=0, keepdims=True) + b3


@jax.custom_vjp
def atom_output(co_fm, cc_bdT, selT, lc_fm, w1T, b1c, w2T, b2c, gc, bec, w3c, b3):
    return _atom_output_pallas(co_fm, cc_bdT, selT, lc_fm, w1T, b1c, w2T, b2c, gc, bec, w3c, b3)


def _atom_output_fwd(*args):
    return _atom_output_pallas(*args), args


def _atom_output_bwd(res, g):
    # TODO(synk): save forward residuals instead of re-running the ref forward inside vjp.
    return jax.vjp(_atom_output_ref, *res)[1](g)


atom_output.defvjp(_atom_output_fwd, _atom_output_bwd)


# ============================== parameter setup ==============================
def _linear_init(key, fan_in, fan_out, bias=None):
    w = (jax.random.normal(key, (fan_in, fan_out)) / np.sqrt(fan_in)).astype(jnp.float32)
    if bias is None:
        b = jnp.zeros((1, fan_out), jnp.float32)
    else:
        b = jnp.asarray(bias, jnp.float32).reshape(1, fan_out)
    return w, b


def _nnmod_init(key, nl, out_dim, initbias):
    keys = jax.random.split(key, len(nl))
    hidden = [_linear_init(keys[i - 1], nl[i - 1], nl[i]) for i in range(1, len(nl))]
    ln = (jnp.ones((1, nl[-1]), jnp.float32), jnp.zeros((1, nl[-1]), jnp.float32))
    out = _linear_init(keys[-1], nl[-1], out_dim, bias=initbias)
    return {"hidden": hidden, "ln": ln, "out": out}


def _nnmod_apply(p, x):
    h = x
    for w, b in p["hidden"]:
        h = jax.nn.silu(h @ w + b)
    g, be = p["ln"]
    mu = jnp.mean(h, axis=-1, keepdims=True)
    var = jnp.mean((h - mu) ** 2, axis=-1, keepdims=True)
    h = (h - mu) * jax.lax.rsqrt(var + 1e-5) * g + be
    w, b = p["out"]
    return h @ w + b


def init_params(key):
    k_cc, k_en, k_ec, k_out, k_b1, k_b2, k_b3 = jax.random.split(key, 7)
    lim = np.sqrt(6.0 / (NWAVE + NCON))
    contracted_coeff = jax.random.uniform(
        k_cc, (ITER_LOOP + 1, RMAXL, NWAVE, NCON), minval=-lim, maxval=lim
    ).astype(jnp.float32)
    initbias_neigh = jnp.concatenate([
        jax.random.normal(k_b1, (NWAVE,)),
        jnp.ones((NWAVE,)),
        jax.random.uniform(k_b2, (NWAVE,)) * np.sqrt(CUTOFF),
    ])
    initbias_center = jax.random.normal(k_b3, (NCON,))
    return {
        "contracted_coeff": contracted_coeff,
        "emb_neigh": _nnmod_init(k_en, EMB_NL, NWAVE * 3, initbias_neigh),
        "emb_center": _nnmod_init(k_ec, EMB_NL, NCON, initbias_center),
        "outnn": _nnmod_init(k_out, OUT_NL, 1, jnp.zeros((1,))),  # initpot = 0.0
    }


def _block_diag_ccT(cc0):
    """(NANG, NWAVE, NCON) -> transposed block-diag (NANG*NCON, CO_PAD)."""
    eye = jnp.eye(NANG, dtype=jnp.float32)
    bd = jnp.einsum('kjm,kl->kjlm', cc0.astype(jnp.float32), eye)       # (9,8,9,64)
    bd = bd.reshape(NANG * NWAVE, NANG * NCON)                          # (72, 576)
    bd = jnp.pad(bd, ((0, CO_PAD - NANG * NWAVE), (0, 0)))              # (128, 576)
    return bd.T                                                         # (576, 128)


# ================================= forward ===================================
def mpnn_forward(params, atom_species, cart, centerlist, neighlist,
                 local_species, neigh_species, nlocal):
    del neigh_species  # unused in the reference forward
    # per-species embedding nets (tiny; plain-JAX glue)
    local_coeff = _nnmod_apply(params["emb_center"], atom_species)      # (natoms, NCON)
    neigh_coeff = _nnmod_apply(params["emb_neigh"], atom_species)       # (natoms, 3*NWAVE)
    emb_fm = neigh_coeff[local_species].T                               # (3*NWAVE, P) feature-major
    lc_fm = local_coeff.T                                               # (NCON, natoms)

    cc0 = params["contracted_coeff"][:, jnp.asarray(INDEX_L)][0]        # (NANG, NWAVE, NCON)
    cc_bdT = _block_diag_ccT(cc0)                                       # (576, 128)
    selT = jnp.tile(jnp.eye(NCON, dtype=jnp.float32), (1, NANG))        # (64, 576)

    ow = params["outnn"]
    (w1, b1), (w2, b2) = ow["hidden"]
    g, be = ow["ln"]
    w3, b3 = ow["out"]                                                  # w3: (NCON, 1)
    w1T, b1c = w1.T, b1.T
    w2T, b2c = w2.T, b2.T
    gc, bec = g.T, be.T

    # scatter-add over centers expressed as a one-hot matmul (feature-major)
    scat = jax.nn.one_hot(centerlist, nlocal, dtype=jnp.float32)        # (P, nlocal)

    def energy_fn(cart_):
        cart_t = cart_.T                                                # (3, natoms)
        distvec_fm = cart_t[:, neighlist] - cart_t[:, centerlist]       # (3, P)
        orbital_fm = pair_orbital(distvec_fm, emb_fm)                   # (72, P)
        center_fm = orbital_fm @ scat                                   # (72, nlocal) == index_add
        co_fm = jnp.pad(center_fm, ((0, CO_PAD - NANG * NWAVE), (0, 0)))  # (128, nlocal)
        out_row = atom_output(co_fm, cc_bdT, selT, lc_fm,
                              w1T, b1c, w2T, b2c, gc, bec, w3, b3)      # (1, nlocal)
        output = out_row.reshape(-1, 1)                                 # (nlocal, 1)
        return jnp.sum(output), output

    (energy, output), grad_cart = jax.value_and_grad(energy_fn, has_aux=True)(cart)
    return energy, -grad_cart.reshape(-1), output


# ==================================== main ===================================
if __name__ == "__main__":
    key = jax.random.PRNGKey(0)
    k_p, k_cart, k_sp, k_c, k_o = jax.random.split(key, 5)

    natoms = 16          # == nlocal
    npairs = 96

    cart = (jax.random.normal(k_cart, (natoms, 3)) * 1.5).astype(jnp.float32)
    atom_species = jax.random.randint(k_sp, (natoms, 1), 1, 4).astype(jnp.float32)

    centerlist = jax.random.randint(k_c, (npairs,), 0, natoms).astype(jnp.int32)
    offsets = jax.random.randint(k_o, (npairs,), 1, natoms).astype(jnp.int32)
    neighlist = ((centerlist + offsets) % natoms).astype(jnp.int32)
    local_species = centerlist                      # per-pair row index into embeddings
    neigh_species = neighlist                       # unused by forward

    params = init_params(k_p)

    energy, force, output = mpnn_forward(
        params, atom_species, cart, centerlist, neighlist,
        local_species, neigh_species, natoms)
    jax.block_until_ready((energy, force, output))

    assert energy.shape == ()
    assert force.shape == (natoms * 3,)
    assert output.shape == (natoms, 1)
    assert bool(jnp.isfinite(energy)) and bool(jnp.all(jnp.isfinite(force)))
    print("KERNEL_OK")
</pallas_src>

<mosaic_0001>
module attributes {stable_mosaic.version = 11 : i64} {
  func.func @_pair_kernel(%arg0: i32, %arg1: memref<3x512xf32, #tpu.memory_space<vmem>>, %arg2: memref<24x512xf32, #tpu.memory_space<vmem>>, %arg3: memref<72x512xf32, #tpu.memory_space<vmem>>) attributes {dimension_semantics = [#tpu.dimension_semantics<parallel>], iteration_bounds = array<i64: 1>, scalar_prefetch = 0 : i64, scratch_operands = 0 : i64, tpu.core_type = #tpu.core_type<tc>, window_params = [{transform_indices = @transform_0, window_bounds = array<i64: 3, 512>}, {transform_indices = @transform_1, window_bounds = array<i64: 24, 512>}, {transform_indices = @transform_2, window_bounds = array<i64: 72, 512>}]} {
    %c0 = arith.constant 0 : index
    %c0_0 = arith.constant 0 : index
    %0 = vector.load %arg1[%c0, %c0_0] : memref<3x512xf32, #tpu.memory_space<vmem>>, vector<1x512xf32>
    %c1 = arith.constant 1 : index
    %c0_1 = arith.constant 0 : index
    %1 = vector.load %arg1[%c1, %c0_1] : memref<3x512xf32, #tpu.memory_space<vmem>>, vector<1x512xf32>
    %c2 = arith.constant 2 : index
    %c0_2 = arith.constant 0 : index
    %2 = vector.load %arg1[%c2, %c0_2] : memref<3x512xf32, #tpu.memory_space<vmem>>, vector<1x512xf32>
    %3 = arith.mulf %0, %0 : vector<1x512xf32>
    %4 = arith.mulf %1, %1 : vector<1x512xf32>
    %5 = arith.addf %3, %4 : vector<1x512xf32>
    %6 = arith.mulf %2, %2 : vector<1x512xf32>
    %7 = arith.addf %5, %6 : vector<1x512xf32>
    %8 = math.sqrt %7 : vector<1x512xf32>
    %cst = arith.constant 0.785398185 : f32
    %9 = vector.broadcast %cst : f32 to vector<1x512xf32>
    %10 = arith.mulf %8, %9 : vector<1x512xf32>
    %11 = math.cos %10 : vector<1x512xf32>
    %cst_3 = arith.constant 5.000000e-01 : f32
    %12 = vector.broadcast %cst_3 : f32 to vector<1x512xf32>
    %13 = arith.mulf %12, %11 : vector<1x512xf32>
    %cst_4 = arith.constant 5.000000e-01 : f32
    %14 = vector.broadcast %cst_4 : f32 to vector<1x512xf32>
    %15 = arith.addf %13, %14 : vector<1x512xf32>
    %16 = arith.mulf %15, %15 : vector<1x512xf32>
    %c0_5 = arith.constant 0 : index
    %c0_6 = arith.constant 0 : index
    %17 = vector.load %arg2[%c0_5, %c0_6] : memref<24x512xf32, #tpu.memory_space<vmem>>, vector<8x512xf32>
    %c8 = arith.constant 8 : index
    %c0_7 = arith.constant 0 : index
    %18 = vector.load %arg2[%c8, %c0_7] : memref<24x512xf32, #tpu.memory_space<vmem>>, vector<8x512xf32>
    %c16 = arith.constant 16 : index
    %c0_8 = arith.constant 0 : index
    %19 = vector.load %arg2[%c16, %c0_8] : memref<24x512xf32, #tpu.memory_space<vmem>>, vector<8x512xf32>
    %20 = vector.broadcast %8 : vector<1x512xf32> to vector<8x512xf32>
    %21 = arith.subf %20, %19 : vector<8x512xf32>
    %22 = arith.mulf %18, %21 : vector<8x512xf32>
    %23 = arith.mulf %22, %22 : vector<8x512xf32>
    %cst_9 = arith.constant 0.000000e+00 : f32
    %24 = vector.broadcast %cst_9 : f32 to vector<8x512xf32>
    %25 = arith.subf %24, %23 : vector<8x512xf32>
    %26 = math.exp %25 : vector<8x512xf32>
    %27 = vector.broadcast %16 : vector<1x512xf32> to vector<8x512xf32>
    %28 = arith.mulf %27, %26 : vector<8x512xf32>
    %29 = arith.mulf %28, %17 : vector<8x512xf32>
    %cst_10 = arith.constant 0.282094806 : f32
    %30 = vector.broadcast %cst_10 : f32 to vector<1x512xf32>
    %cst_11 = arith.constant 0.488602519 : f32
    %31 = vector.broadcast %cst_11 : f32 to vector<1x512xf32>
    %32 = arith.mulf %31, %1 : vector<1x512xf32>
    %cst_12 = arith.constant 0.488602519 : f32
    %33 = vector.broadcast %cst_12 : f32 to vector<1x512xf32>
    %34 = arith.mulf %33, %2 : vector<1x512xf32>
    %cst_13 = arith.constant 0.488602519 : f32
    %35 = vector.broadcast %cst_13 : f32 to vector<1x512xf32>
    %36 = arith.mulf %35, %0 : vector<1x512xf32>
    %cst_14 = arith.constant 1.09254849 : f32
    %37 = vector.broadcast %cst_14 : f32 to vector<1x512xf32>
    %38 = arith.mulf %37, %0 : vector<1x512xf32>
    %39 = arith.mulf %38, %1 : vector<1x512xf32>
    %cst_15 = arith.constant 1.09254849 : f32
    %40 = vector.broadcast %cst_15 : f32 to vector<1x512xf32>
    %41 = arith.mulf %40, %1 : vector<1x512xf32>
    %42 = arith.mulf %41, %2 : vector<1x512xf32>
    %cst_16 = arith.constant 3.000000e+00 : f32
    %43 = vector.broadcast %cst_16 : f32 to vector<1x512xf32>
    %44 = arith.mulf %43, %2 : vector<1x512xf32>
    %45 = arith.mulf %44, %2 : vector<1x512xf32>
    %46 = arith.subf %45, %7 : vector<1x512xf32>
    %cst_17 = arith.constant 0.31539157 : f32
    %47 = vector.broadcast %cst_17 : f32 to vector<1x512xf32>
    %48 = arith.mulf %47, %46 : vector<1x512xf32>
    %cst_18 = arith.constant 1.09254849 : f32
    %49 = vector.broadcast %cst_18 : f32 to vector<1x512xf32>
    %50 = arith.mulf %49, %0 : vector<1x512xf32>
    %51 = arith.mulf %50, %2 : vector<1x512xf32>
    %52 = arith.mulf %0, %0 : vector<1x512xf32>
    %53 = arith.mulf %1, %1 : vector<1x512xf32>
    %54 = arith.subf %52, %53 : vector<1x512xf32>
    %cst_19 = arith.constant 0.546274245 : f32
    %55 = vector.broadcast %cst_19 : f32 to vector<1x512xf32>
    %56 = arith.mulf %55, %54 : vector<1x512xf32>
    %57 = vector.broadcast %30 : vector<1x512xf32> to vector<8x512xf32>
    %58 = arith.mulf %57, %29 : vector<8x512xf32>
    %c0_20 = arith.constant 0 : index
    %c0_21 = arith.constant 0 : index
    %59 = vector.load %arg3[%c0_20, %c0_21] : memref<72x512xf32, #tpu.memory_space<vmem>>, vector<8x512xf32>
    tpu.vector_store %arg3[%c0_20, %c0_21], %58 {strides = array<i32>} : memref<72x512xf32, #tpu.memory_space<vmem>>, vector<8x512xf32>,
    %60 = vector.broadcast %32 : vector<1x512xf32> to vector<8x512xf32>
    %61 = arith.mulf %60, %29 : vector<8x512xf32>
    %c8_22 = arith.constant 8 : index
    %c0_23 = arith.constant 0 : index
    %62 = vector.load %arg3[%c8_22, %c0_23] : memref<72x512xf32, #tpu.memory_space<vmem>>, vector<8x512xf32>
    tpu.vector_store %arg3[%c8_22, %c0_23], %61 {strides = array<i32>} : memref<72x512xf32, #tpu.memory_space<vmem>>, vector<8x512xf32>,
    %63 = vector.broadcast %34 : vector<1x512xf32> to vector<8x512xf32>
    %64 = arith.mulf %63, %29 : vector<8x512xf32>
    %c16_24 = arith.constant 16 : index
    %c0_25 = arith.constant 0 : index
    %65 = vector.load %arg3[%c16_24, %c0_25] : memref<72x512xf32, #tpu.memory_space<vmem>>, vector<8x512xf32>
    tpu.vector_store %arg3[%c16_24, %c0_25], %64 {strides = array<i32>} : memref<72x512xf32, #tpu.memory_space<vmem>>, vector<8x512xf32>,
    %66 = vector.broadcast %36 : vector<1x512xf32> to vector<8x512xf32>
    %67 = arith.mulf %66, %29 : vector<8x512xf32>
    %c24 = arith.constant 24 : index
    %c0_26 = arith.constant 0 : index
    %68 = vector.load %arg3[%c24, %c0_26] : memref<72x512xf32, #tpu.memory_space<vmem>>, vector<8x512xf32>
    tpu.vector_store %arg3[%c24, %c0_26], %67 {strides = array<i32>} : memref<72x512xf32, #tpu.memory_space<vmem>>, vector<8x512xf32>,
    %69 = vector.broadcast %39 : vector<1x512xf32> to vector<8x512xf32>
    %70 = arith.mulf %69, %29 : vector<8x512xf32>
    %c32 = arith.constant 32 : index
    %c0_27 = arith.constant 0 : index
    %71 = vector.load %arg3[%c32, %c0_27] : memref<72x512xf32, #tpu.memory_space<vmem>>, vector<8x512xf32>
    tpu.vector_store %arg3[%c32, %c0_27], %70 {strides = array<i32>} : memref<72x512xf32, #tpu.memory_space<vmem>>, vector<8x512xf32>,
    %72 = vector.broadcast %42 : vector<1x512xf32> to vector<8x512xf32>
    %73 = arith.mulf %72, %29 : vector<8x512xf32>
    %c40 = arith.constant 40 : index
    %c0_28 = arith.constant 0 : index
    %74 = vector.load %arg3[%c40, %c0_28] : memref<72x512xf32, #tpu.memory_space<vmem>>, vector<8x512xf32>
    tpu.vector_store %arg3[%c40, %c0_28], %73 {strides = array<i32>} : memref<72x512xf32, #tpu.memory_space<vmem>>, vector<8x512xf32>,
    %75 = vector.broadcast %48 : vector<1x512xf32> to vector<8x512xf32>
    %76 = arith.mulf %75, %29 : vector<8x512xf32>
    %c48 = arith.constant 48 : index
    %c0_29 = arith.constant 0 : index
    %77 = vector.load %arg3[%c48, %c0_29] : memref<72x512xf32, #tpu.memory_space<vmem>>, vector<8x512xf32>
    tpu.vector_store %arg3[%c48, %c0_29], %76 {strides = array<i32>} : memref<72x512xf32, #tpu.memory_space<vmem>>, vector<8x512xf32>,
    %78 = vector.broadcast %51 : vector<1x512xf32> to vector<8x512xf32>
    %79 = arith.mulf %78, %29 : vector<8x512xf32>
    %c56 = arith.constant 56 : index
    %c0_30 = arith.constant 0 : index
    %80 = vector.load %arg3[%c56, %c0_30] : memref<72x512xf32, #tpu.memory_space<vmem>>, vector<8x512xf32>
    tpu.vector_store %arg3[%c56, %c0_30], %79 {strides = array<i32>} : memref<72x512xf32, #tpu.memory_space<vmem>>, vector<8x512xf32>,
    %81 = vector.broadcast %56 : vector<1x512xf32> to vector<8x512xf32>
    %82 = arith.mulf %81, %29 : vector<8x512xf32>
    %c64 = arith.constant 64 : index
    %c0_31 = arith.constant 0 : index
    %83 = vector.load %arg3[%c64, %c0_31] : memref<72x512xf32, #tpu.memory_space<vmem>>, vector<8x512xf32>
    tpu.vector_store %arg3[%c64, %c0_31], %82 {strides = array<i32>} : memref<72x512xf32, #tpu.memory_space<vmem>>, vector<8x512xf32>,
    return
  }
  func.func @transform_0(%arg0: i32) -> (i32, i32) {
    %c0_i32 = arith.constant 0 : i32
    %c0_i32_0 = arith.constant 0 : i32
    return %c0_i32, %arg0 : i32, i32
  }
  func.func @transform_1(%arg0: i32) -> (i32, i32) {
    %c0_i32 = arith.constant 0 : i32
    %c0_i32_0 = arith.constant 0 : i32
    return %c0_i32, %arg0 : i32, i32
  }
  func.func @transform_2(%arg0: i32) -> (i32, i32) {
    %c0_i32 = arith.constant 0 : i32
    %c0_i32_0 = arith.constant 0 : i32
    return %c0_i32, %arg0 : i32, i32
  }
}

</mosaic_0001>

<llo_original>
// kernel: tpu_custom_call.1
$region0: #{tpu_custom_call.1}
  #allocation0 [shape = 'u32[]', space=smem, size = 0x4, offset = 0x4, fixed_abs, tag = 'smem constant byte address 0x4 - core index']
  #allocation1 [shape = 'u32[72,128]{1,0:T(1,128)}', space=vmem, size = 0x9000, scoped, tag = 'internal scratch']
  %s0 = inlined_call_operand.hbm [shape: f32[3,512], index: 0, kind: input, shape index: {}]
  %s1 = inlined_call_operand.hbm [shape: f32[24,512], index: 1, kind: input, shape index: {}]
  %s2 = inlined_call_operand.hbm [shape: f32[72,512], index: 2, kind: output, shape index: {}]
  %s3 = sld [smem:[#allocation0]]
  $region26: #{tpu_custom_call.1} parent=0
    _
  %s5 = ssub.s32 1, %s3
  %s6 = scalar_select 0, %s5, %s3
  $region1: #{tpu_custom_call.1} parent=0
    #allocation2 [shape = 'u8[8192]{0}', space=vmem, size = 0x2000, scoped, tag = 'input window, operand 0, single buffered']
    #allocation3 [shape = 's32[1]{0}', space=sflag, size = 0x4, scoped, tag = 'scoped memory for tpu_custom_call.1']
    #allocation4 [shape = 's32[1]{0}', space=sflag, size = 0x4, scoped, tag = 'scoped memory for tpu_custom_call.1']
    #allocation5 [shape = 'u8[49152]{0}', space=vmem, size = 0xc000, scoped, tag = 'input window, operand 1, single buffered']
    #allocation6 [shape = 's32[1]{0}', space=sflag, size = 0x4, scoped, tag = 'scoped memory for tpu_custom_call.1']
    #allocation7 [shape = 'u8[147456]{0}', space=vmem, size = 0x24000, scoped, tag = 'output window, operand 0, single buffered']
    %7 = vsyncpa [#allocation3], 0
    %8 = vsyncpa [#allocation6], 0
    %9 = vsyncpa [#allocation4], 0
    // Predicated region
    $region2: #{tpu_custom_call.1} parent=1 // pred_check
      _
    $region3: #{tpu_custom_call.1} parent=1 // pred_check_branch
      %11 = sbr.rel (0) target = $region5
    $region4: #{tpu_custom_call.1} parent=1 // pred_region
      %13 = vsyncadd [#allocation3], 0
      %s15 = sshll.u32 %s0, 4
      %s16 = int_to_ptr.hbm [resolvable:$true] %s15
      %s17 = sshll.u32 [#allocation2], 4
      %s18 = int_to_ptr.vmem [resolvable:$true] %s17
      %20 = dma.hbm_to_vmem [thread:$0]  %s16, 256, %s18, [#allocation3]
    $region5: #{tpu_custom_call.1} parent=1 // pred_fallthru
      _
    // Predicated region
    $region6: #{tpu_custom_call.1} parent=1 // pred_check
      _
    $region7: #{tpu_custom_call.1} parent=1 // pred_check_branch
      %22 = sbr.rel (0) target = $region9
    $region8: #{tpu_custom_call.1} parent=1 // pred_region
      %24 = vsyncadd [#allocation6], 0
      %s25 = sshll.u32 %s1, 4
      %s26 = int_to_ptr.hbm [resolvable:$true] %s25
      %s27 = sshll.u32 [#allocation5], 4
      %s28 = int_to_ptr.vmem [resolvable:$true] %s27
      %33 = dma.hbm_to_vmem [thread:$0]  %s26, 1536, %s28, [#allocation6], 512, 512, 32
    $region9: #{tpu_custom_call.1} parent=1 // pred_fallthru
      _
    // Predicated region
    $region10: #{tpu_custom_call.1} parent=1 // pred_check
      _
    $region11: #{tpu_custom_call.1} parent=1 // pred_check_branch
      %35 = sbr.rel (0) target = $region13
    $region12: #{tpu_custom_call.1} parent=1 // pred_region
      %37 = dma.done [#allocation3], 256
    $region13: #{tpu_custom_call.1} parent=1 // pred_fallthru
      _
    // Predicated region
    $region14: #{tpu_custom_call.1} parent=1 // pred_check
      _
    $region15: #{tpu_custom_call.1} parent=1 // pred_check_branch
      %39 = sbr.rel (0) target = $region17
    $region16: #{tpu_custom_call.1} parent=1 // pred_region
      %41 = dma.done [#allocation6], 1536
    $region17: #{tpu_custom_call.1} parent=1 // pred_fallthru
      _
    %v42 = vld [vmem:[#allocation2] ss:$4 sm:$0xf]
    %s43 = scalar_lea.vmem [#allocation2], 1
    %v44 = vld [vmem:[%s43] ss:$4 sm:$0xf]
    %s45 = scalar_lea.vmem [#allocation2], 2
    %v46 = vld [vmem:[%s45] ss:$4 sm:$0xf]
    %v47 = vmul.f32 %v42, %v42
    %v48 = vmul.f32 %v44, %v44
    %v49 = vadd.f32 %v47, %v48
    %v50 = vmul.f32 %v46, %v46
    %v51 = vadd.f32 %v49, %v50
    %v52 = vrsqrt.pop %v51
    %v53 = vmul.f32 %v52, %v51
    %v54 = vmul.f32 %v53, %v52
    %v55 = vmul.f32 0.5, %v54
    %v56 = vsub.f32 1.5, %v55
    %v57 = vmul.f32 %v52, %v56
    %v58 = vmul.f32 %v51, %v57
    %vm59 = vcmp.eq.f32.partialorder %v51, inf
    %v60 = vsel %vm59, %v51, %v58
    %vm61 = vcmp.eq.f32.partialorder %v51, 0.0
    %v62 = vand.u32 %v51, 2147483648
    %v63 = vsel %vm61, %v62, %v60
    %v64 = vmul.f32 %v63, 0.7853982
    %v65 = vand.u32 2147483647, %v64
    %vm66 = vcmp.le.f32.partialorder %v65, 0.7853982
    %vm67 = vcmp.lt.s32.totalorder %v64, 0
    %v68 = vand.u32 %v64, 2139095040
    %v69 = vshrl.u32 %v68, 23
    %v70 = vsub.s32 %v69, 127
    %v71 = vand.u32 2147483647, %v64
    %v72 = vand.u32 %v71, 8388607
    %v73 = vor.u32 %v72, 8388608
    %v74 = vsub.s32 0, %v73
    %v75 = vadd.s32 %v70, 1
    %vm76 = vcmp.gt.s32.totalorder %v75, 0
    %v77 = vsel %vm76, %v75, 0
    %v78 = vshrl.u32 %v77, 5
    %v79 = vand.u32 %v77, 31
    %v80 = vsub.s32 32, %v79
    %v81 = vshrl.u32 683565275, %v80
    %v82 = vshll.u32 683565275, %v79
    %v83 = vshrl.u32 2475754826, %v80
    %v84 = vor.u32 %v82, %v83
    %v85 = vshll.u32 2475754826, %v79
    %v86 = vshrl.u32 2131351028, %v80
    %v87 = vor.u32 %v85, %v86
    %v88 = vshll.u32 2131351028, %v79
    %v89 = vshrl.u32 2102212464, %v80
    %v90 = vor.u32 %v88, %v89
    %v91 = vshll.u32 2102212464, %v79
    %v92 = vshrl.u32 920167782, %v80
    %v93 = vor.u32 %v91, %v92
    %v94 = vshll.u32 920167782, %v79
    %v95 = vshrl.u32 1326507024, %v80
    %v96 = vor.u32 %v94, %v95
    %vm97 = vcmp.lt.s32.totalorder %v78, 1
    %vm98 = vcmp.lt.s32.totalorder %v78, 2
    %vm99 = vcmp.lt.s32.totalorder %v78, 3
    %vm100 = vcmp.lt.s32.totalorder %v78, 4
    %v101 = vsel %vm97, %v81, %v84
    %v102 = vsel %vm100, %v90, 2102212464
    %v103 = vsel %vm99, %v87, %v102
    %v104 = vsel %vm98, %v101, %v103
    %v105 = vsel %vm97, %v84, %v87
    %v106 = vsel %vm100, %v93, 920167782
    %v107 = vsel %vm99, %v90, %v106
    %v108 = vsel %vm98, %v105, %v107
    %v109 = vsel %vm97, %v87, %v90
    %v110 = vsel %vm100, %v96, 1326507024
    %v111 = vsel %vm99, %v93, %v110
    %v112 = vsel %vm98, %v109, %v111
    %v113 = vshll.u32 %v73, 8
    %v114 = vand.u32 %v113, 65535
    %v115 = vshrl.u32 %v113, 16
    %v116 = vand.u32 %v112, 65535
    %v117 = vshrl.u32 %v112, 16
    %v118 = vmul.u32 %v114, %v116
    %v119 = vmul.u32 %v114, %v117
    %v120 = vmul.u32 %v115, %v116
    %v121 = vmul.u32 %v115, %v117
    %v122 = vshll.u32 %v119, 16
    %v123 = vshrl.u32 %v119, 16
    %v124 = vshll.u32 %v120, 16
    %v125 = vshrl.u32 %v120, 16
    %vm126 = vc.u32 %v118, %v122
    %v127 = vsel %vm126, 1, 0
    %v128 = vadd.s32 %v118, %v122
    %v129 = vadd.s32 %v121, %v127
    %vm130 = vc.u32 %v128, %v124
    %v131 = vsel %vm130, 1, 0
    %v132 = vadd.s32 %v128, %v124
    %v133 = vadd.s32 %v129, %v131
    %v134 = vadd.s32 %v133, %v123
    %v135 = vadd.s32 %v134, %v125
    %v136 = vand.u32 %v113, 65535
    %v137 = vshrl.u32 %v113, 16
    %v138 = vand.u32 %v108, 65535
    %v139 = vshrl.u32 %v108, 16
    %v140 = vmul.u32 %v136, %v138
    %v141 = vmul.u32 %v136, %v139
    %v142 = vmul.u32 %v137, %v138
    %v143 = vmul.u32 %v137, %v139
    %v144 = vshll.u32 %v141, 16
    %v145 = vshrl.u32 %v141, 16
    %v146 = vshll.u32 %v142, 16
    %v147 = vshrl.u32 %v142, 16
    %vm148 = vc.u32 %v140, %v144
    %v149 = vsel %vm148, 1, 0
    %v150 = vadd.s32 %v140, %v144
    %v151 = vadd.s32 %v143, %v149
    %vm152 = vc.u32 %v150, %v146
    %v153 = vsel %vm152, 1, 0
    %v154 = vadd.s32 %v150, %v146
    %v155 = vadd.s32 %v151, %v153
    %v156 = vadd.s32 %v155, %v145
    %v157 = vadd.s32 %v156, %v147
    %v158 = vmul.u32 %v113, %v104
    %v159 = vadd.s32 %v135, %v154
    %vm160 = vc.u32 %v135, %v154
    %v161 = vadd.s32 %v157, 1
    %v162 = vsel %vm160, %v161, %v157
    %v163 = vadd.s32 %v158, %v162
    %v164 = vadd.s32 %v163, 536870912
    %v165 = vshrl.u32 %v164, 30
    %v166 = vshll.u32 %v165, 30
    %v167 = vsub.s32 %v163, %v166
    %vm168 = vcmp.lt.s32.totalorder %v167, 0
    %v169 = vsub.s32 0, %v167
    %v170 = vsel %vm168, %v169, %v167
    %v171 = vclz %v170
    %v172 = vsub.s32 %v171, 2
    %vm173 = vcmp.gt.s32.totalorder 0, %v172
    %v174 = vsel %vm173, 0, %v172
    %v175 = vsub.s32 32, %v174
    %v176 = vshll.u32 %v167, %v174
    %v177 = vshrl.u32 %v159, %v175
    %v178 = vor.u32 %v176, %v177
    %v179 = vsub.s32 4294967266, %v174
    %v180 = vadd.s32 %v179, 127
    %v181 = vshll.u32 %v180, 23
    %v182 = vor.u32 4788187, %v181
    %v183 = vand.u32 2147483647, %v182
    %v185 = vcvt.s32.f32 %v178
    %v186 = vmul.f32 %v185, %v183
    %v187 = vxor.u32 %v186, 2147483648
    %v188 = vsel %vm67, %v187, %v186
    %v189 = vsub.s32 4, %v165
    %v190 = vsel %vm67, %v189, %v165
    %v191 = vsel %vm66, %v64, %v188
    %v192 = vsel %vm66, 0, %v190
    %v193 = vmul.f32 %v191, %v191
    %v194 = vmul.f32 %v193, -0.001358992
    %v195 = vadd.f32 %v194, 0.041655596
    %v196 = vmul.f32 %v193, %v195
    %v197 = vadd.f32 %v196, -0.4999988
    %v198 = vmul.f32 %v193, %v197
    %v199 = vadd.f32 1.0, %v198
    %v200 = vmul.f32 %v191, %v191
    %v201 = vmul.f32 %v200, -0.00019511016
    %v202 = vadd.f32 %v201, 0.008332121
    %v203 = vmul.f32 %v200, %v202
    %v204 = vadd.f32 %v203, -0.16666654
    %v205 = vmul.f32 %v200, %v204
    %v206 = vadd.f32 %v205, 1.0
    %v207 = vmul.f32 %v206, %v191
    %vm208 = vweird.f32 %v64
    %v209 = vand.u32 %v192, 3
    %vm210 = vcmp.lt.s32.totalorder %v209, 2
    %vm211 = vcmp.eq.s32.totalorder %v209, 0
    %v212 = vxor.u32 %v207, 2147483648
    %v213 = vsel %vm211, %v199, %v212
    %vm214 = vcmp.eq.s32.totalorder %v209, 2
    %v215 = vxor.u32 %v199, 2147483648
    %v216 = vsel %vm214, %v215, %v207
    %v217 = vsel %vm210, %v213, %v216
    %v218 = vsel %vm208, nan, %v217
    %v219 = vmul.f32 %v218, 0.5
    %v220 = vadd.f32 %v219, 0.5
    %v221 = vmul.f32 %v220, %v220
    %v222 = vld [vmem:[#allocation5] sm:$0xff]
    %v223 = vld [vmem:[#allocation5 + $0x8] sm:$0xff]
    %v224 = vld [vmem:[#allocation5 + $0x10] sm:$0xff]
    %v225 = vld [vmem:[#allocation5 + $0x18] sm:$0xff]
    %v226 = vld [vmem:[#allocation5 + $0x20] sm:$0xff]
    %v227 = vld [vmem:[#allocation5 + $0x28] sm:$0xff]
    %v228 = vld [vmem:[#allocation5 + $0x30] sm:$0xff]
    %v229 = vld [vmem:[#allocation5 + $0x38] sm:$0xff]
    %v230 = vld [vmem:[#allocation5 + $0x40] sm:$0xff]
    %v231 = vld [vmem:[#allocation5 + $0x48] sm:$0xff]
    %v232 = vld [vmem:[#allocation5 + $0x50] sm:$0xff]
    %v233 = vld [vmem:[#allocation5 + $0x58] sm:$0xff]
    %v235 = vperm.slane %v63, 0
    %v236 = vperm.slane %v63, 1
    %v237 = vperm.slane %v63, 2
    %v238 = vperm.slane %v63, 3
    %v243 = vsub.f32 %v235, %v230
    %v244 = vsub.f32 %v236, %v231
    %v245 = vsub.f32 %v237, %v232
    %v246 = vsub.f32 %v238, %v233
    %v247 = vmul.f32 %v226, %v243
    %v248 = vmul.f32 %v227, %v244
    %v249 = vmul.f32 %v228, %v245
    %v250 = vmul.f32 %v229, %v246
    %v251 = vmul.f32 %v247, %v247
    %v252 = vmul.f32 %v248, %v248
    %v253 = vmul.f32 %v249, %v249
    %v254 = vmul.f32 %v250, %v250
    %v255 = vsub.f32 0.0, %v251
    %v256 = vsub.f32 0.0, %v252
    %v257 = vsub.f32 0.0, %v253
    %v258 = vsub.f32 0.0, %v254
    %v259 = vmul.f32 %v255, 1.442695
    %v260 = vpow.pop %v259
    %v261 = vmul.f32 %v256, 1.442695
    %v262 = vpow.pop %v261
    %v263 = vmul.f32 %v257, 1.442695
    %v264 = vpow.pop %v263
    %v265 = vmul.f32 %v258, 1.442695
    %v266 = vpow.pop %v265
    %v268 = vperm.slane %v221, 0
    %v269 = vperm.slane %v221, 1
    %v270 = vperm.slane %v221, 2
    %v271 = vperm.slane %v221, 3
    %v276 = vmul.f32 %v268, %v260
    %v277 = vmul.f32 %v269, %v262
    %v278 = vmul.f32 %v270, %v264
    %v279 = vmul.f32 %v271, %v266
    %v280 = vmul.f32 %v276, %v222
    %v281 = vmul.f32 %v277, %v223
    %v282 = vmul.f32 %v278, %v224
    %v283 = vmul.f32 %v279, %v225
    %v284 = vmul.f32 %v44, 0.48860252
    %v285 = vmul.f32 %v46, 0.48860252
    %v286 = vmul.f32 %v42, 0.48860252
    %v287 = vmul.f32 %v42, 1.0925485
    %v288 = vmul.f32 %v287, %v44
    %v289 = vmul.f32 %v44, 1.0925485
    %v290 = vmul.f32 %v289, %v46
    %v291 = vmul.f32 %v46, 3.0
    %v292 = vmul.f32 %v291, %v46
    %v293 = vsub.f32 %v292, %v51
    %v294 = vmul.f32 %v293, 0.31539157
    %v295 = vmul.f32 %v287, %v46
    %v296 = vsub.f32 %v47, %v48
    %v297 = vmul.f32 %v296, 0.54627424
    %v298 = vmul.f32 %v280, 0.2820948
    %v299 = vmul.f32 %v281, 0.2820948
    %v300 = vmul.f32 %v282, 0.2820948
    %v301 = vmul.f32 %v283, 0.2820948
    %302 = vst [vmem:[#allocation7] sm:$0xff] %v298
    %303 = vst [vmem:[#allocation7 + $0x8] sm:$0xff] %v299
    %304 = vst [vmem:[#allocation7 + $0x10] sm:$0xff] %v300
    %305 = vst [vmem:[#allocation7 + $0x18] sm:$0xff] %v301
    %v307 = vperm.slane %v284, 0
    %v308 = vperm.slane %v284, 1
    %v309 = vperm.slane %v284, 2
    %v310 = vperm.slane %v284, 3
    %v315 = vmul.f32 %v307, %v280
    %v316 = vmul.f32 %v308, %v281
    %v317 = vmul.f32 %v309, %v282
    %v318 = vmul.f32 %v310, %v283
    %319 = vst [vmem:[#allocation7 + $0x20] sm:$0xff] %v315
    %320 = vst [vmem:[#allocation7 + $0x28] sm:$0xff] %v316
    %321 = vst [vmem:[#allocation7 + $0x30] sm:$0xff] %v317
    %322 = vst [vmem:[#allocation7 + $0x38] sm:$0xff] %v318
    %v324 = vperm.slane %v285, 0
    %v325 = vperm.slane %v285, 1
    %v326 = vperm.slane %v285, 2
    %v327 = vperm.slane %v285, 3
    %v332 = vmul.f32 %v324, %v280
    %v333 = vmul.f32 %v325, %v281
    %v334 = vmul.f32 %v326, %v282
    %v335 = vmul.f32 %v327, %v283
    %336 = vst [vmem:[#allocation7 + $0x40] sm:$0xff] %v332
    %337 = vst [vmem:[#allocation7 + $0x48] sm:$0xff] %v333
    %338 = vst [vmem:[#allocation7 + $0x50] sm:$0xff] %v334
    %339 = vst [vmem:[#allocation7 + $0x58] sm:$0xff] %v335
    %v341 = vperm.slane %v286, 0
    %v342 = vperm.slane %v286, 1
    %v343 = vperm.slane %v286, 2
    %v344 = vperm.slane %v286, 3
    %v349 = vmul.f32 %v341, %v280
    %v350 = vmul.f32 %v342, %v281
    %v351 = vmul.f32 %v343, %v282
    %v352 = vmul.f32 %v344, %v283
    %353 = vst [vmem:[#allocation7 + $0x60] sm:$0xff] %v349
    %354 = vst [vmem:[#allocation7 + $0x68] sm:$0xff] %v350
    %355 = vst [vmem:[#allocation7 + $0x70] sm:$0xff] %v351
    %356 = vst [vmem:[#allocation7 + $0x78] sm:$0xff] %v352
    %v358 = vperm.slane %v288, 0
    %v359 = vperm.slane %v288, 1
    %v360 = vperm.slane %v288, 2
    %v361 = vperm.slane %v288, 3
    %v366 = vmul.f32 %v358, %v280
    %v367 = vmul.f32 %v359, %v281
    %v368 = vmul.f32 %v360, %v282
    %v369 = vmul.f32 %v361, %v283
    %370 = vst [vmem:[#allocation7 + $0x80] sm:$0xff] %v366
    %371 = vst [vmem:[#allocation7 + $0x88] sm:$0xff] %v367
    %372 = vst [vmem:[#allocation7 + $0x90] sm:$0xff] %v368
    %373 = vst [vmem:[#allocation7 + $0x98] sm:$0xff] %v369
    %v375 = vperm.slane %v290, 0
    %v376 = vperm.slane %v290, 1
    %v377 = vperm.slane %v290, 2
    %v378 = vperm.slane %v290, 3
    %v383 = vmul.f32 %v375, %v280
    %v384 = vmul.f32 %v376, %v281
    %v385 = vmul.f32 %v377, %v282
    %v386 = vmul.f32 %v378, %v283
    %387 = vst [vmem:[#allocation7 + $0xa0] sm:$0xff] %v383
    %388 = vst [vmem:[#allocation7 + $0xa8] sm:$0xff] %v384
    %389 = vst [vmem:[#allocation7 + $0xb0] sm:$0xff] %v385
    %390 = vst [vmem:[#allocation7 + $0xb8] sm:$0xff] %v386
    %v392 = vperm.slane %v294, 0
    %v393 = vperm.slane %v294, 1
    %v394 = vperm.slane %v294, 2
    %v395 = vperm.slane %v294, 3
    %v400 = vmul.f32 %v392, %v280
    %v401 = vmul.f32 %v393, %v281
    %v402 = vmul.f32 %v394, %v282
    %v403 = vmul.f32 %v395, %v283
    %404 = vst [vmem:[#allocation7 + $0xc0] sm:$0xff] %v400
    %405 = vst [vmem:[#allocation7 + $0xc8] sm:$0xff] %v401
    %406 = vst [vmem:[#allocation7 + $0xd0] sm:$0xff] %v402
    %407 = vst [vmem:[#allocation7 + $0xd8] sm:$0xff] %v403
    %v409 = vperm.slane %v295, 0
    %v410 = vperm.slane %v295, 1
    %v411 = vperm.slane %v295, 2
    %v412 = vperm.slane %v295, 3
    %v417 = vmul.f32 %v409, %v280
    %v418 = vmul.f32 %v410, %v281
    %v419 = vmul.f32 %v411, %v282
    %v420 = vmul.f32 %v412, %v283
    %421 = vst [vmem:[#allocation7 + $0xe0] sm:$0xff] %v417
    %422 = vst [vmem:[#allocation7 + $0xe8] sm:$0xff] %v418
    %423 = vst [vmem:[#allocation7 + $0xf0] sm:$0xff] %v419
    %424 = vst [vmem:[#allocation7 + $0xf8] sm:$0xff] %v420
    %v426 = vperm.slane %v297, 0
    %v427 = vperm.slane %v297, 1
    %v428 = vperm.slane %v297, 2
    %v429 = vperm.slane %v297, 3
    %v434 = vmul.f32 %v426, %v280
    %v435 = vmul.f32 %v427, %v281
    %v436 = vmul.f32 %v428, %v282
    %v437 = vmul.f32 %v429, %v283
    %438 = vst [vmem:[#allocation7 + $0x100] sm:$0xff] %v434
    %439 = vst [vmem:[#allocation7 + $0x108] sm:$0xff] %v435
    %440 = vst [vmem:[#allocation7 + $0x110] sm:$0xff] %v436
    %441 = vst [vmem:[#allocation7 + $0x118] sm:$0xff] %v437
    // Predicated region
    $region18: #{tpu_custom_call.1} parent=1 // pred_check
      _
    $region19: #{tpu_custom_call.1} parent=1 // pred_check_branch
      %443 = sbr.rel (0) target = $region21
    $region20: #{tpu_custom_call.1} parent=1 // pred_region
      %445 = vsyncadd [#allocation4], 0
      %s446 = sshll.u32 [#allocation7], 4
      %s447 = int_to_ptr.vmem [resolvable:$true] %s446
      %s448 = sshll.u32 %s2, 4
      %s449 = int_to_ptr.hbm [resolvable:$true] %s448
      %454 = dma.vmem_to_hbm [thread:$0]  %s447, 4608, %s449, [#allocation4], 512, 512, 32
    $region21: #{tpu_custom_call.1} parent=1 // pred_fallthru
      _
    // Predicated region
    $region22: #{tpu_custom_call.1} parent=1 // pred_check
      _
    $region23: #{tpu_custom_call.1} parent=1 // pred_check_branch
      %456 = sbr.rel (0) target = $region25
    $region24: #{tpu_custom_call.1} parent=1 // pred_region
      %458 = dma.done [#allocation4], 4608
    $region25: #{tpu_custom_call.1} parent=1 // pred_fallthru
      _
    %459 = vsyncpa [#allocation3], 1
    %460 = vsyncpa [#allocation6], 1
    %461 = vsyncpa [#allocation4], 1

</llo_original>
